<compile_context>
chip_gen: v7x
topology: tpu7x:2x2x1
jax: 0.10.0
libtpu: 0.0.40
codegen_flags: <defaults>
</compile_context>

<pallas_src>
import functools

import jax
import jax.numpy as jnp
import numpy as np
from jax.experimental import pallas as pl
from jax.experimental.pallas import tpu as pltpu


# ---------------------------------------------------------------------------
# Sizing helpers (padded-dim aware, chip aware)
# ---------------------------------------------------------------------------

def _cdiv(a, b):
    return -(-a // b)


def _round_up(x, m):
    return ((x + m - 1) // m) * m


def _sublane_pack(dtype):
    # rows per packed sublane: f32 -> 8, bf16 -> 16, int8/fp8 -> 32
    return max(8, 32 // jnp.dtype(dtype).itemsize)


def _vmem_capacity_bytes():
    try:
        return int(pltpu.get_tpu_info().vmem_capacity_bytes)
    except Exception:
        return 64 * 1024 * 1024        # conservative (v7x per-core VMEM)


_VMEM_CAP = _vmem_capacity_bytes()
# Bigger blocks on 128-MiB-VMEM parts (v5e/v6e); conservative on v7x (64 MiB).
_TARGET_BLOCK_BYTES = (4 << 20) if _VMEM_CAP >= (96 << 20) else (2 << 20)


def _vmem_limit(total_bytes):
    need = int(total_bytes * 1.25) + (2 << 20)
    return int(min(max(need, 16 << 20), int(_VMEM_CAP * 0.9)))


def _compiler_params(n_axes, vmem_bytes):
    return pltpu.CompilerParams(
        dimension_semantics=("parallel",) * n_axes,
        vmem_limit_bytes=vmem_bytes)


# ---------------------------------------------------------------------------
# Capability probes (run once; keep the script robust across Pallas versions)
# ---------------------------------------------------------------------------

def _probe_erf():
    try:
        def k(x_ref, o_ref):
            o_ref[...] = jax.lax.erf(x_ref[...])
        x = jnp.zeros((8, 128), jnp.float32)
        jax.block_until_ready(
            pl.pallas_call(
                k, out_shape=jax.ShapeDtypeStruct((8, 128), jnp.float32))(x))
        return True
    except Exception:
        return False


def _probe_single_buffered():
    try:
        mode = pl.Buffered(1)

        def k(x_ref, o_ref):
            o_ref[...] = x_ref[...] + 1.0

        x = jnp.zeros((8, 128), jnp.float32)
        f = pl.pallas_call(
            k,
            out_shape=jax.ShapeDtypeStruct((16, 128), jnp.float32),
            grid=(2,),
            in_specs=[pl.BlockSpec((8, 128), lambda i: (0, 0),
                                   pipeline_mode=mode)],
            out_specs=pl.BlockSpec((8, 128), lambda i: (i, 0)),
        )
        jax.block_until_ready(f(x))
        return True
    except Exception:
        return False


_EXACT_GELU = _probe_erf()                  # nn.GELU() default = exact erf form
_SINGLE_BUF_WEIGHTS = _probe_single_buffered()


def _param_spec(shape, index_map, *, constant=False):
    """BlockSpec for a parameter; constant blocks are single-buffered."""
    if constant and _SINGLE_BUF_WEIGHTS:
        return pl.BlockSpec(shape, index_map, pipeline_mode=pl.Buffered(1))
    return pl.BlockSpec(shape, index_map)


# ---------------------------------------------------------------------------
# Depthwise Conv1d kernel (nn.Conv1d(dim, dim, K, padding=K//2, groups=dim))
# ---------------------------------------------------------------------------

def _dwconv_kernel(x_ref, w_ref, b_ref, o_ref, *, K, pad):
    x = x_ref[...].astype(jnp.float32)               # (tb, tc, L)
    tb, tc, L = x.shape
    if pad > 0:
        zeros = jnp.zeros((tb, tc, pad), jnp.float32)
        xp = jnp.concatenate([zeros, x, zeros], axis=2)
    else:
        xp = x
    w = w_ref[...].astype(jnp.float32)               # (tc, K)
    acc = jnp.zeros((tb, tc, L), jnp.float32)
    for j in range(K):                                # static tap unroll
        wj = w[:, j:j + 1][None, :, :]                # (1, tc, 1)
        acc = acc + wj * xp[:, :, j:j + L]
    acc = acc + b_ref[...].astype(jnp.float32)[None, :, :]
    o_ref[...] = acc.astype(o_ref.dtype)


def depthwise_conv1d(x, w, b, kernel_size):
    """PyTorch nn.Conv1d(C, C, kernel_size, padding=kernel_size//2, groups=C).

    x: (B, C, L);  w: (C, kernel_size) (squeezed (C,1,K) torch weight);  b: (C,)
    """
    if kernel_size % 2 != 1:
        raise NotImplementedError("even kernel_size changes the sequence length")
    B, C, L = x.shape
    pad = kernel_size // 2
    dtype = x.dtype
    itemsize = jnp.dtype(dtype).itemsize
    pack = _sublane_pack(dtype)
    lane_bytes = _round_up(L, 128) * itemsize
    target = _TARGET_BLOCK_BYTES

    # channel tile (sublane axis, padded accounting); batch packing if tiny
    if _round_up(C, pack) * lane_bytes <= target:
        tc = C
        tb = int(min(B, max(1, target // (_round_up(C, pack) * lane_bytes))))
    else:
        tc = max(pack, (target // lane_bytes) // pack * pack)
        tb = 1
    n_b, n_c = _cdiv(B, tb), _cdiv(C, tc)
    if n_b * n_c < 2:                       # keep both v7x TensorCores busy
        if tb > 1:
            tb = (tb + 1) // 2
            n_b = _cdiv(B, tb)
        elif tc > pack:
            tc = _round_up(_cdiv(C, 2), pack)
            n_c = _cdiv(C, tc)

    tc_pad = _round_up(tc, pack)
    act_bytes = 2 * 2 * tb * tc_pad * _round_up(L, 128) * itemsize
    tmp_bytes = 3 * tb * tc_pad * _round_up(L + 2 * pad, 128) * 4
    par_bytes = 2 * (tc_pad * _round_up(kernel_size, 128) * 4 + tc_pad * 128 * 4)
    limit = _vmem_limit(act_bytes + tmp_bytes + par_bytes)

    w2d = w.reshape(C, kernel_size).astype(jnp.float32)
    b2d = b.reshape(C, 1).astype(jnp.float32)

    return pl.pallas_call(
        functools.partial(_dwconv_kernel, K=kernel_size, pad=pad),
        out_shape=jax.ShapeDtypeStruct((B, C, L), dtype),
        grid_spec=pltpu.PrefetchScalarGridSpec(
            num_scalar_prefetch=0,
            grid=(n_b, n_c),
            in_specs=[
                pl.BlockSpec((tb, tc, L), lambda bi, ci: (bi, ci, 0)),
                _param_spec((tc, kernel_size), lambda bi, ci: (ci, 0)),
                _param_spec((tc, 1), lambda bi, ci: (ci, 0)),
            ],
            out_specs=pl.BlockSpec((tb, tc, L), lambda bi, ci: (bi, ci, 0)),
        ),
        compiler_params=_compiler_params(2, limit),
    )(x, w2d, b2d)


# ---------------------------------------------------------------------------
# Fused LN(C) -> pwconv1 -> GELU -> pwconv2 -> gamma (-> +residual) kernel
# ---------------------------------------------------------------------------

def _fused_block_kernel(*refs, eps, tb, add_residual, exact_gelu):
    if add_residual:
        (y_ref, xres_ref, lnw_ref, lnb_ref, w1_ref, b1_ref,
         w2_ref, b2_ref, g_ref, o_ref) = refs
    else:
        (y_ref, lnw_ref, lnb_ref, w1_ref, b1_ref,
         w2_ref, b2_ref, g_ref, o_ref) = refs
        xres_ref = None

    lnw = lnw_ref[...]                 # (C, 1) f32
    lnb = lnb_ref[...]                 # (C, 1)
    w1 = w1_ref[...]                   # (H, C)
    b1 = b1_ref[...]                   # (H, 1)
    w2 = w2_ref[...]                   # (C, H)
    b2 = b2_ref[...]                   # (C, 1)
    g = g_ref[...]                     # (C, 1)

    for i in range(tb):                # static unroll over the packed batch tile
        y = y_ref[i].astype(jnp.float32)                  # (C, tl)
        mean = jnp.mean(y, axis=0, keepdims=True)         # sublane reduce over C
        yc = y - mean
        var = jnp.mean(yc * yc, axis=0, keepdims=True)    # biased, as in the ref
        inv = jax.lax.rsqrt(var + eps)
        xn = yc * (inv * lnw) + lnb                       # fused LN affine
        h = jnp.dot(w1, xn.astype(w1.dtype),
                    preferred_element_type=jnp.float32) + b1      # (H, tl)
        if exact_gelu:
            h = 0.5 * h * (1.0 + jax.lax.erf(h * (1.0 / np.sqrt(2.0))))
        else:
            h = jax.nn.gelu(h, approximate=True)
        z = jnp.dot(w2, h.astype(w2.dtype),
                    preferred_element_type=jnp.float32) + b2      # (C, tl)
        z = z * g
        if add_residual:
            z = z + xres_ref[i].astype(jnp.float32)
        o_ref[i] = z.astype(o_ref.dtype)


def _act_tiles(B, C, L, dtype, *, block_bytes=None, max_tb=8):
    """Choose (tb, tl) activation tiles from PADDED byte footprints."""
    target = block_bytes or _TARGET_BLOCK_BYTES
    itemsize = jnp.dtype(dtype).itemsize
    pack = _sublane_pack(dtype)
    c_pad = _round_up(C, pack)
    col_bytes = c_pad * itemsize
    tl_cap = max(128, (target // col_bytes) // 128 * 128)
    if L <= tl_cap:
        tl = L
        slab = c_pad * _round_up(L, 128) * itemsize
        tb = int(min(B, max_tb, max(1, target // slab)))
    else:
        tl, tb = tl_cap, 1
    n_b, n_l = _cdiv(B, tb), _cdiv(L, tl)
    if n_b * n_l < 2:                   # keep both v7x TensorCores busy
        if tb > 1:
            tb = (tb + 1) // 2
            n_b = _cdiv(B, tb)
        elif L >= 256:
            tl = _round_up(_cdiv(L, 2), 128)
            n_l = _cdiv(L, tl)
    return tb, tl, n_b, n_l


def fused_ln_mlp(y_dw, x_res, ln_w, ln_b, w1, b1, w2, b2, gamma, *,
                 eps=1e-6, add_residual=True, block_bytes=None):
    """LayerNorm over C + Linear(C,4C) + GELU + Linear(4C,C) + gamma
    (+ residual), on (B, C, L) tiles -- no NCHW<->NHWC transposes."""
    B, C, L = y_dw.shape
    H = w1.shape[0]
    dtype = y_dw.dtype
    itemsize = jnp.dtype(dtype).itemsize
    pack = _sublane_pack(dtype)
    c_pad = _round_up(C, pack)

    tb, tl, n_b, n_l = _act_tiles(B, C, L, dtype, block_bytes=block_bytes)

    f32 = jnp.float32
    ln_w2 = ln_w.reshape(C, 1).astype(f32)
    ln_b2 = ln_b.reshape(C, 1).astype(f32)
    w1f = w1.astype(f32)                          # (H, C) torch (out, in) layout
    b1f = b1.reshape(H, 1).astype(f32)
    w2f = w2.astype(f32)                          # (C, H)
    b2f = b2.reshape(C, 1).astype(f32)
    gf = (jnp.ones((C,), f32) if gamma is None else gamma.astype(f32)).reshape(C, 1)

    # VMEM budget from padded footprints (+ internal f32 temporaries).
    act_streams = 3 if add_residual else 2
    tl_pad = _round_up(tl, 128)
    act_bytes = act_streams * 2 * tb * c_pad * tl_pad * itemsize
    wf = 1 if _SINGLE_BUF_WEIGHTS else 2

    def pbytes(sub, lane):
        return _round_up(sub, 8) * _round_up(lane, 128) * 4

    const_bytes = wf * (pbytes(H, C) + pbytes(C, H)
                        + 4 * pbytes(C, 1) + pbytes(H, 1))
    tmp_bytes = (2 * _round_up(H, 8) + 8 * c_pad) * tl_pad * 4
    limit = _vmem_limit(act_bytes + const_bytes + tmp_bytes)

    act_spec = pl.BlockSpec((tb, C, tl), lambda bi, li: (bi, 0, li))
    const = lambda shape: _param_spec(shape, lambda bi, li: (0, 0), constant=True)

    in_specs = [act_spec]
    inputs = [y_dw]
    if add_residual:
        in_specs.append(act_spec)
        inputs.append(x_res)
    in_specs += [const((C, 1)), const((C, 1)),
                 const((H, C)), const((H, 1)),
                 const((C, H)), const((C, 1)),
                 const((C, 1))]
    inputs += [ln_w2, ln_b2, w1f, b1f, w2f, b2f, gf]

    kernel = functools.partial(_fused_block_kernel, eps=eps, tb=tb,
                               add_residual=add_residual, exact_gelu=_EXACT_GELU)
    return pl.pallas_call(
        kernel,
        out_shape=jax.ShapeDtypeStruct((B, C, L), dtype),
        grid_spec=pltpu.PrefetchScalarGridSpec(
            num_scalar_prefetch=0,
            grid=(n_b, n_l),
            in_specs=in_specs,
            out_specs=act_spec,
        ),
        compiler_params=_compiler_params(2, limit),
    )(*inputs)


# ---------------------------------------------------------------------------
# SE path: out = x_input + z * gate[:, :, None]
# ---------------------------------------------------------------------------

def _gate_residual_kernel(x_ref, z_ref, g_ref, o_ref):
    o_ref[...] = (x_ref[...].astype(jnp.float32)
                  + z_ref[...].astype(jnp.float32) * g_ref[...]).astype(o_ref.dtype)


def apply_channel_gate_residual(x, z, gate):
    B, C, L = x.shape
    dtype = x.dtype
    itemsize = jnp.dtype(dtype).itemsize
    pack = _sublane_pack(dtype)
    tb, tl, n_b, n_l = _act_tiles(B, C, L, dtype)
    act_bytes = 3 * 2 * tb * _round_up(C, pack) * _round_up(tl, 128) * itemsize
    gate_bytes = 2 * tb * _round_up(C, pack) * 128 * 4
    limit = _vmem_limit(act_bytes + gate_bytes)

    g3 = gate.reshape(B, C, 1).astype(jnp.float32)
    act_spec = pl.BlockSpec((tb, C, tl), lambda bi, li: (bi, 0, li))
    gate_spec = pl.BlockSpec((tb, C, 1), lambda bi, li: (bi, 0, 0))
    return pl.pallas_call(
        _gate_residual_kernel,
        out_shape=jax.ShapeDtypeStruct((B, C, L), dtype),
        grid_spec=pltpu.PrefetchScalarGridSpec(
            num_scalar_prefetch=0,
            grid=(n_b, n_l),
            in_specs=[act_spec, act_spec, gate_spec],
            out_specs=act_spec,
        ),
        compiler_params=_compiler_params(2, limit),
    )(x, z, g3)


# ---------------------------------------------------------------------------
# Block forward
# ---------------------------------------------------------------------------

def block_forward(x, params, *, kernel_size, eps=1e-6, use_se=False,
                  use_cbam=False, fused_block_bytes=None):
    """ConvNeXt Block forward (inference: DropPath == identity).

    x: (B, C, L) channels-first, exactly as the PyTorch module receives it.
    """
    if use_cbam:
        # TODO(synk): CBAM attention module was not provided with the spec.
        raise NotImplementedError("CBAM attention is not implemented")
    y = depthwise_conv1d(x, params["dw_w"], params["dw_b"], kernel_size)
    if not use_se:
        return fused_ln_mlp(y, x, params["ln_w"], params["ln_b"],
                            params["w1"], params["b1"], params["w2"], params["b2"],
                            params.get("gamma"), eps=eps, add_residual=True,
                            block_bytes=fused_block_bytes)
    z = fused_ln_mlp(y, None, params["ln_w"], params["ln_b"],
                     params["w1"], params["b1"], params["w2"], params["b2"],
                     params.get("gamma"), eps=eps, add_residual=False,
                     block_bytes=fused_block_bytes)
    # TODO(synk): SE squeeze (global avg-pool over L + two tiny Linears on a
    # (B, C) tensor) stays in plain JAX; the heavy gate*z + residual is Pallas.
    pooled = jnp.mean(z.astype(jnp.float32), axis=-1)
    h = jnp.maximum(pooled @ params["se_w1"].T + params["se_b1"], 0.0)
    gate = jax.nn.sigmoid(h @ params["se_w2"].T + params["se_b2"])
    return apply_channel_gate_residual(x, z, gate)


# ---------------------------------------------------------------------------
# Pure-JAX reference (mirrors the PyTorch module)
# ---------------------------------------------------------------------------

def _block_reference(x, params, *, kernel_size, eps=1e-6, use_se=False):
    B, C, L = x.shape
    pad = kernel_size // 2
    hp = jax.lax.Precision.HIGHEST
    xp = jnp.pad(x, ((0, 0), (0, 0), (pad, pad)))
    y = jnp.zeros_like(x)
    for j in range(kernel_size):
        y = y + params["dw_w"][None, :, j:j + 1] * xp[:, :, j:j + L]
    y = y + params["dw_b"][None, :, None]
    t = jnp.transpose(y, (0, 2, 1))                   # (B, L, C)
    u = jnp.mean(t, axis=-1, keepdims=True)
    s = jnp.mean((t - u) ** 2, axis=-1, keepdims=True)
    t = (t - u) / jnp.sqrt(s + eps) * params["ln_w"] + params["ln_b"]
    t = jnp.matmul(t, params["w1"].T, precision=hp) + params["b1"]
    t = jax.nn.gelu(t, approximate=not _EXACT_GELU)
    t = jnp.matmul(t, params["w2"].T, precision=hp) + params["b2"]
    if params.get("gamma") is not None:
        t = t * params["gamma"]
    z = jnp.transpose(t, (0, 2, 1))                   # (B, C, L)
    if use_se:
        p = jnp.mean(z, axis=-1)
        h = jnp.maximum(p @ params["se_w1"].T + params["se_b1"], 0.0)
        g = jax.nn.sigmoid(h @ params["se_w2"].T + params["se_b2"])
        z = z * g[:, :, None]
    return x + z


# ---------------------------------------------------------------------------
# Demo / correctness check
# ---------------------------------------------------------------------------

def _make_params(key, dim, hidden, kernel_size):
    ks = list(jax.random.split(key, 13))
    f32 = jnp.float32
    r = dim // 4 if dim >= 4 else 1
    return {
        "dw_w": 0.3 * jax.random.normal(ks[0], (dim, kernel_size), f32),
        "dw_b": 0.1 * jax.random.normal(ks[1], (dim,), f32),
        "ln_w": 1.0 + 0.1 * jax.random.normal(ks[2], (dim,), f32),
        "ln_b": 0.05 * jax.random.normal(ks[3], (dim,), f32),
        "w1": 0.2 * jax.random.normal(ks[4], (hidden, dim), f32),
        "b1": 0.05 * jax.random.normal(ks[5], (hidden,), f32),
        "w2": 0.2 * jax.random.normal(ks[6], (dim, hidden), f32),
        "b2": 0.05 * jax.random.normal(ks[7], (dim,), f32),
        "gamma": 0.5 + 0.1 * jax.random.normal(ks[8], (dim,), f32),
        "se_w1": 0.3 * jax.random.normal(ks[9], (r, dim), f32),
        "se_b1": 0.05 * jax.random.normal(ks[10], (r,), f32),
        "se_w2": 0.3 * jax.random.normal(ks[11], (dim, r), f32),
        "se_b2": 0.05 * jax.random.normal(ks[12], (dim,), f32),
    }


if __name__ == "__main__":
    key = jax.random.PRNGKey(0)
    k_small, k_big, kx1, kx2 = jax.random.split(key, 4)
    TOL = dict(rtol=5e-3, atol=5e-3)   # covers MXU f32 pass-precision variation

    # --- small case: B=2, dim=4, L=16, kernel_size=7 -----------------------
    dim, hidden, K = 4, 16, 7
    p_small = _make_params(k_small, dim, hidden, K)
    x_small = jax.random.normal(kx1, (2, dim, 16), jnp.float32)

    out = jax.block_until_ready(
        block_forward(x_small, p_small, kernel_size=K, use_se=False))
    ref = _block_reference(x_small, p_small, kernel_size=K, use_se=False)
    np.testing.assert_allclose(np.asarray(out), np.asarray(ref), **TOL)

    out_se = jax.block_until_ready(
        block_forward(x_small, p_small, kernel_size=K, use_se=True))
    ref_se = _block_reference(x_small, p_small, kernel_size=K, use_se=True)
    np.testing.assert_allclose(np.asarray(out_se), np.asarray(ref_se), **TOL)

    # --- larger case: exercises L tiling + ragged tail + 2x2 grid ----------
    dim2, hidden2 = 96, 384
    p_big = _make_params(k_big, dim2, hidden2, K)
    x_big = jax.random.normal(kx2, (2, dim2, 300), jnp.float32)

    out_big = jax.block_until_ready(
        block_forward(x_big, p_big, kernel_size=K, use_se=False,
                      fused_block_bytes=128 * 1024))   # force L tiling
    ref_big = _block_reference(x_big, p_big, kernel_size=K, use_se=False)
    np.testing.assert_allclose(np.asarray(out_big), np.asarray(ref_big), **TOL)

    print("KERNEL_OK")
</pallas_src>

<mosaic_0001>
module attributes {stable_mosaic.version = 11 : i64} {
  func.func @k(%arg0: memref<8x128xf32, #tpu.memory_space<vmem>>, %arg1: memref<8x128xf32, #tpu.memory_space<vmem>>) attributes {dimension_semantics = [], scalar_prefetch = 0 : i64, scratch_operands = 0 : i64, tpu.core_type = #tpu.core_type<tc>} {
    %c0 = arith.constant 0 : index
    %c0_0 = arith.constant 0 : index
    %0 = vector.load %arg0[%c0, %c0_0] : memref<8x128xf32, #tpu.memory_space<vmem>>, vector<8x128xf32>
    %1 = math.erf %0 : vector<8x128xf32>
    %c0_1 = arith.constant 0 : index
    %c0_2 = arith.constant 0 : index
    %2 = vector.load %arg1[%c0_1, %c0_2] : memref<8x128xf32, #tpu.memory_space<vmem>>, vector<8x128xf32>
    tpu.vector_store %arg1[%c0_1, %c0_2], %1 {strides = array<i32>} : memref<8x128xf32, #tpu.memory_space<vmem>>, vector<8x128xf32>,
    return
  }
}

module attributes {stable_mosaic.version = 11 : i64} {
  func.func @k(%arg0: i32, %arg1: memref<8x128xf32, #tpu.memory_space<vmem>>, %arg2: memref<8x128xf32, #tpu.memory_space<vmem>>) attributes {dimension_semantics = [#tpu.dimension_semantics<arbitrary>], iteration_bounds = array<i64: 2>, scalar_prefetch = 0 : i64, scratch_operands = 0 : i64, tpu.core_type = #tpu.core_type<tc>, window_params = [{pipeline_mode = #tpu.pipeline_mode<synchronous>, transform_indices = @transform_0, window_bounds = array<i64: 8, 128>}, {transform_indices = @transform_1, window_bounds = array<i64: 8, 128>}]} {
    %c0 = arith.constant 0 : index
    %c0_0 = arith.constant 0 : index
    %0 = vector.load %arg1[%c0, %c0_0] : memref<8x128xf32, #tpu.memory_space<vmem>>, vector<8x128xf32>
    %cst = arith.constant 1.000000e+00 : f32
    %1 = vector.broadcast %cst : f32 to vector<8x128xf32>
    %2 = arith.addf %0, %1 : vector<8x128xf32>
    %c0_1 = arith.constant 0 : index
    %c0_2 = arith.constant 0 : index
    %3 = vector.load %arg2[%c0_1, %c0_2] : memref<8x128xf32, #tpu.memory_space<vmem>>, vector<8x128xf32>
    tpu.vector_store %arg2[%c0_1, %c0_2], %2 {strides = array<i32>} : memref<8x128xf32, #tpu.memory_space<vmem>>, vector<8x128xf32>,
    return
  }
  func.func @transform_0(%arg0: i32) -> (i32, i32) {
    %c0_i32 = arith.constant 0 : i32
    %c0_i32_0 = arith.constant 0 : i32
    %c0_i32_1 = arith.constant 0 : i32
    return %c0_i32, %c0_i32_0 : i32, i32
  }
  func.func @transform_1(%arg0: i32) -> (i32, i32) {
    %c0_i32 = arith.constant 0 : i32
    %c0_i32_0 = arith.constant 0 : i32
    return %arg0, %c0_i32 : i32, i32
  }
}

module attributes {stable_mosaic.version = 11 : i64} {
  func.func @_dwconv_kernel(%arg0: i32, %arg1: i32, %arg2: memref<1x4x16xf32, #tpu.memory_space<vmem>>, %arg3: memref<4x7xf32, #tpu.memory_space<vmem>>, %arg4: memref<4x1xf32, #tpu.memory_space<vmem>>, %arg5: memref<1x4x16xf32, #tpu.memory_space<vmem>>) attributes {dimension_semantics = [#tpu.dimension_semantics<parallel>, #tpu.dimension_semantics<parallel>], iteration_bounds = array<i64: 2, 1>, scalar_prefetch = 0 : i64, scratch_operands = 0 : i64, tpu.core_type = #tpu.core_type<tc>, window_params = [{transform_indices = @transform_0, window_bounds = array<i64: 1, 4, 16>}, {transform_indices = @transform_1, window_bounds = array<i64: 4, 7>}, {transform_indices = @transform_2, window_bounds = array<i64: 4, 1>}, {transform_indices = @transform_3, window_bounds = array<i64: 1, 4, 16>}]} {
    %c0 = arith.constant 0 : index
    %c0_0 = arith.constant 0 : index
    %c0_1 = arith.constant 0 : index
    %0 = vector.load %arg2[%c0, %c0_0, %c0_1] : memref<1x4x16xf32, #tpu.memory_space<vmem>>, vector<1x4x16xf32>
    %cst = arith.constant 0.000000e+00 : f32
    %1 = vector.broadcast %cst : f32 to vector<1x4x3xf32>
    %2 = tpu.concatenate %1, %0, %1 in 2 : vector<1x4x3xf32>, vector<1x4x16xf32>, vector<1x4x3xf32> -> vector<1x4x22xf32>
    %c0_2 = arith.constant 0 : index
    %c0_3 = arith.constant 0 : index
    %3 = vector.load %arg3[%c0_2, %c0_3] : memref<4x7xf32, #tpu.memory_space<vmem>>, vector<4x7xf32>
    %cst_4 = arith.constant 0.000000e+00 : f32
    %4 = vector.broadcast %cst_4 : f32 to vector<1x4x16xf32>
    %5 = vector.extract_strided_slice %3 {offsets = [0, 0], sizes = [4, 1], strides = [1, 1]} : vector<4x7xf32> to vector<4x1xf32>
    %6 = vector.shape_cast %5 : vector<4x1xf32> to vector<1x4x1xf32>
    %7 = vector.extract_strided_slice %2 {offsets = [0, 0, 0], sizes = [1, 4, 16], strides = [1, 1, 1]} : vector<1x4x22xf32> to vector<1x4x16xf32>
    %8 = vector.broadcast %6 : vector<1x4x1xf32> to vector<1x4x16xf32>
    %9 = arith.mulf %8, %7 : vector<1x4x16xf32>
    %10 = arith.addf %4, %9 : vector<1x4x16xf32>
    %11 = vector.extract_strided_slice %3 {offsets = [0, 1], sizes = [4, 1], strides = [1, 1]} : vector<4x7xf32> to vector<4x1xf32>
    %12 = vector.shape_cast %11 : vector<4x1xf32> to vector<1x4x1xf32>
    %13 = vector.extract_strided_slice %2 {offsets = [0, 0, 1], sizes = [1, 4, 16], strides = [1, 1, 1]} : vector<1x4x22xf32> to vector<1x4x16xf32>
    %14 = vector.broadcast %12 : vector<1x4x1xf32> to vector<1x4x16xf32>
    %15 = arith.mulf %14, %13 : vector<1x4x16xf32>
    %16 = arith.addf %10, %15 : vector<1x4x16xf32>
    %17 = vector.extract_strided_slice %3 {offsets = [0, 2], sizes = [4, 1], strides = [1, 1]} : vector<4x7xf32> to vector<4x1xf32>
    %18 = vector.shape_cast %17 : vector<4x1xf32> to vector<1x4x1xf32>
    %19 = vector.extract_strided_slice %2 {offsets = [0, 0, 2], sizes = [1, 4, 16], strides = [1, 1, 1]} : vector<1x4x22xf32> to vector<1x4x16xf32>
    %20 = vector.broadcast %18 : vector<1x4x1xf32> to vector<1x4x16xf32>
    %21 = arith.mulf %20, %19 : vector<1x4x16xf32>
    %22 = arith.addf %16, %21 : vector<1x4x16xf32>
    %23 = vector.extract_strided_slice %3 {offsets = [0, 3], sizes = [4, 1], strides = [1, 1]} : vector<4x7xf32> to vector<4x1xf32>
    %24 = vector.shape_cast %23 : vector<4x1xf32> to vector<1x4x1xf32>
    %25 = vector.extract_strided_slice %2 {offsets = [0, 0, 3], sizes = [1, 4, 16], strides = [1, 1, 1]} : vector<1x4x22xf32> to vector<1x4x16xf32>
    %26 = vector.broadcast %24 : vector<1x4x1xf32> to vector<1x4x16xf32>
    %27 = arith.mulf %26, %25 : vector<1x4x16xf32>
    %28 = arith.addf %22, %27 : vector<1x4x16xf32>
    %29 = vector.extract_strided_slice %3 {offsets = [0, 4], sizes = [4, 1], strides = [1, 1]} : vector<4x7xf32> to vector<4x1xf32>
    %30 = vector.shape_cast %29 : vector<4x1xf32> to vector<1x4x1xf32>
    %31 = vector.extract_strided_slice %2 {offsets = [0, 0, 4], sizes = [1, 4, 16], strides = [1, 1, 1]} : vector<1x4x22xf32> to vector<1x4x16xf32>
    %32 = vector.broadcast %30 : vector<1x4x1xf32> to vector<1x4x16xf32>
    %33 = arith.mulf %32, %31 : vector<1x4x16xf32>
    %34 = arith.addf %28, %33 : vector<1x4x16xf32>
    %35 = vector.extract_strided_slice %3 {offsets = [0, 5], sizes = [4, 1], strides = [1, 1]} : vector<4x7xf32> to vector<4x1xf32>
    %36 = vector.shape_cast %35 : vector<4x1xf32> to vector<1x4x1xf32>
    %37 = vector.extract_strided_slice %2 {offsets = [0, 0, 5], sizes = [1, 4, 16], strides = [1, 1, 1]} : vector<1x4x22xf32> to vector<1x4x16xf32>
    %38 = vector.broadcast %36 : vector<1x4x1xf32> to vector<1x4x16xf32>
    %39 = arith.mulf %38, %37 : vector<1x4x16xf32>
    %40 = arith.addf %34, %39 : vector<1x4x16xf32>
    %41 = vector.extract_strided_slice %3 {offsets = [0, 6], sizes = [4, 1], strides = [1, 1]} : vector<4x7xf32> to vector<4x1xf32>
    %42 = vector.shape_cast %41 : vector<4x1xf32> to vector<1x4x1xf32>
    %43 = vector.extract_strided_slice %2 {offsets = [0, 0, 6], sizes = [1, 4, 16], strides = [1, 1, 1]} : vector<1x4x22xf32> to vector<1x4x16xf32>
    %44 = vector.broadcast %42 : vector<1x4x1xf32> to vector<1x4x16xf32>
    %45 = arith.mulf %44, %43 : vector<1x4x16xf32>
    %46 = arith.addf %40, %45 : vector<1x4x16xf32>
    %c0_5 = arith.constant 0 : index
    %c0_6 = arith.constant 0 : index
    %47 = vector.load %arg4[%c0_5, %c0_6] : memref<4x1xf32, #tpu.memory_space<vmem>>, vector<4x1xf32>
    %48 = vector.shape_cast %47 : vector<4x1xf32> to vector<1x4x1xf32>
    %49 = vector.broadcast %48 : vector<1x4x1xf32> to vector<1x4x16xf32>
    %50 = arith.addf %46, %49 : vector<1x4x16xf32>
    %c0_7 = arith.constant 0 : index
    %c0_8 = arith.constant 0 : index
    %c0_9 = arith.constant 0 : index
    %51 = vector.load %arg5[%c0_7, %c0_8, %c0_9] : memref<1x4x16xf32, #tpu.memory_space<vmem>>, vector<1x4x16xf32>
    tpu.vector_store %arg5[%c0_7, %c0_8, %c0_9], %50 {strides = array<i32>} : memref<1x4x16xf32, #tpu.memory_space<vmem>>, vector<1x4x16xf32>,
    return
  }
  func.func @transform_0(%arg0: i32, %arg1: i32) -> (i32, i32, i32) {
    %c0_i32 = arith.constant 0 : i32
    %c0_i32_0 = arith.constant 0 : i32
    return %arg0, %arg1, %c0_i32 : i32, i32, i32
  }
  func.func @transform_1(%arg0: i32, %arg1: i32) -> (i32, i32) {
    %c0_i32 = arith.constant 0 : i32
    %c0_i32_0 = arith.constant 0 : i32
    return %arg1, %c0_i32 : i32, i32
  }
  func.func @transform_2(%arg0: i32, %arg1: i32) -> (i32, i32) {
    %c0_i32 = arith.constant 0 : i32
    %c0_i32_0 = arith.constant 0 : i32
    return %arg1, %c0_i32 : i32, i32
  }
  func.func @transform_3(%arg0: i32, %arg1: i32) -> (i32, i32, i32) {
    %c0_i32 = arith.constant 0 : i32
    %c0_i32_0 = arith.constant 0 : i32
    return %arg0, %arg1, %c0_i32 : i32, i32, i32
  }
}

</mosaic_0001>

<llo_original>
// kernel: tpu_custom_call.1
$region0: #{tpu_custom_call.1}
  #allocation0 [shape = 'u32[]', space=smem, size = 0x4, offset = 0x4, fixed_abs, tag = 'smem constant byte address 0x4 - core index']
  #allocation1 [shape = 'u32[144,128]{1,0:T(1,128)}', space=vmem, size = 0x12000, scoped, tag = 'internal scratch']
  %s0 = inlined_call_operand.hbm [shape: f32[8,128], index: 0, kind: input, shape index: {}]
  %s1 = inlined_call_operand.hbm [shape: f32[8,128], index: 1, kind: output, shape index: {}]
  %s2 = sld [smem:[#allocation0]]
  $region18: #{tpu_custom_call.1} parent=0
    _
  %s4 = ssub.s32 1, %s2
  %s5 = scalar_select 0, %s4, %s2
  $region1: #{tpu_custom_call.1} parent=0
    #allocation2 [shape = 'u8[4096]{0}', space=vmem, size = 0x1000, scoped, tag = 'input window, operand 0, single buffered']
    #allocation3 [shape = 's32[1]{0}', space=sflag, size = 0x4, scoped, tag = 'scoped memory for tpu_custom_call.1']
    #allocation4 [shape = 's32[1]{0}', space=sflag, size = 0x4, scoped, tag = 'scoped memory for tpu_custom_call.1']
    #allocation5 [shape = 'u8[4096]{0}', space=vmem, size = 0x1000, scoped, tag = 'output window, operand 0, single buffered']
    %6 = vsyncpa [#allocation3], 0
    %7 = vsyncpa [#allocation4], 0
    // Predicated region
    $region2: #{tpu_custom_call.1} parent=1 // pred_check
      _
    $region3: #{tpu_custom_call.1} parent=1 // pred_check_branch
      %9 = sbr.rel (0) target = $region5
    $region4: #{tpu_custom_call.1} parent=1 // pred_region
      %s11 = ssub.s32 128, 128
      %12 = vsyncadd [#allocation3], %s11
      %s14 = sshll.u32 [#allocation2], 4
      %s15 = int_to_ptr.vmem [resolvable:$true] %s14
      %17 = dma.hbm_to_vmem [thread:$0]  %s0, 128, %s15, [#allocation3]
    $region5: #{tpu_custom_call.1} parent=1 // pred_fallthru
      _
    // Predicated region
    $region6: #{tpu_custom_call.1} parent=1 // pred_check
      _
    $region7: #{tpu_custom_call.1} parent=1 // pred_check_branch
      %19 = sbr.rel (0) target = $region9
    $region8: #{tpu_custom_call.1} parent=1 // pred_region
      %20 = dma.done [#allocation3], 128
    $region9: #{tpu_custom_call.1} parent=1 // pred_fallthru
      _
    %v21 = vld [vmem:[#allocation2] sm:$0xff]
    %v22 = verf.f32.pop %v21
    %23 = vst [vmem:[#allocation5] sm:$0xff] %v22
    // Predicated region
    $region10: #{tpu_custom_call.1} parent=1 // pred_check
      _
    $region11: #{tpu_custom_call.1} parent=1 // pred_check_branch
      %25 = sbr.rel (0) target = $region13
    $region12: #{tpu_custom_call.1} parent=1 // pred_region
      %s27 = ssub.s32 128, 128
      %28 = vsyncadd [#allocation4], %s27
      %s30 = sshll.u32 [#allocation5], 4
      %s31 = int_to_ptr.vmem [resolvable:$true] %s30
      %33 = dma.vmem_to_hbm [thread:$0]  %s31, 128, %s1, [#allocation4]
    $region13: #{tpu_custom_call.1} parent=1 // pred_fallthru
      _
    // Predicated region
    $region14: #{tpu_custom_call.1} parent=1 // pred_check
      _
    $region15: #{tpu_custom_call.1} parent=1 // pred_check_branch
      %35 = sbr.rel (0) target = $region17
    $region16: #{tpu_custom_call.1} parent=1 // pred_region
      %36 = dma.done [#allocation4], 128
    $region17: #{tpu_custom_call.1} parent=1 // pred_fallthru
      _
    %37 = vsyncpa [#allocation3], 1
    %38 = vsyncpa [#allocation4], 1

// kernel: tpu_custom_call.1
$region0: #{tpu_custom_call.1}
  #allocation0 [shape = 'u32[]', space=smem, size = 0x4, offset = 0x4, fixed_abs, tag = 'smem constant byte address 0x4 - core index']
  #allocation1 [shape = 'u32[144,128]{1,0:T(1,128)}', space=vmem, size = 0x12000, scoped, tag = 'internal scratch']
  %s0 = inlined_call_operand.hbm [shape: f32[8,128], index: 0, kind: input, shape index: {}]
  %s1 = inlined_call_operand.hbm [shape: f32[16,128], index: 1, kind: output, shape index: {}]
  %s2 = sld [smem:[#allocation0]]
  $region41: #{tpu_custom_call.1} parent=0
    _
  %s4 = ssub.s32 1, %s2
  %s5 = scalar_select 0, %s4, %s2
  $region1: #{tpu_custom_call.1} parent=0
    #allocation2 [shape = 'u8[4096]{0}', space=vmem, size = 0x1000, scoped, tag = 'input window, operand 0, single buffered']
    #allocation3 [shape = 's32[2]{0}', space=sflag, size = 0x8, scoped, tag = 'scoped memory for tpu_custom_call.1']
    #allocation4 [shape = 's32[2]{0}', space=sflag, size = 0x8, scoped, tag = 'scoped memory for tpu_custom_call.1']
    #allocation5 [shape = 'u8[8192]{0}', space=vmem, size = 0x2000, scoped, tag = 'output window, operand 0']
    %6 = vsyncpa [#allocation3], 0
    %7 = vsyncpa [#allocation4], 0
    %s8 = scalar_lea.sflag [#allocation4], 1
    %9 = vsyncpa %s8, 0
    loop: start=0, step=1, limit=4
    $region2: #{tpu_custom_call.1} parent=1 // loop_pre_header
      _
    $region3: #{tpu_custom_call.1} parent=1 // loop_header
      %s11 = sphi 0, %s15
      %p12 = scmp.ge.s32.totalorder %s11, 4
      %s19 = sphi 0, %s19
      %s21 = sphi 0, %s19
      %s22 = sphi 0, %s21
      %s36 = sphi 0, %s22
      %s42 = sphi 0, %s44
      %s45 = sphi 0, %s42
      %s46 = sphi 0, %s45
      %s62 = sphi 0, %s46
    $region4: #{tpu_custom_call.1} parent=1 // loop_header_branch
      %14 = sbr.rel (%p12) target = $region8
    $region5: #{tpu_custom_call.1} parent=1 // loop_body
      %s16 = ssub.s32 %s11, 1
      %s17 = ssub.s32 %s11, 2
      %s18 = sadd.s32 %s11, 1
      %s20 = sadd.s32 %s19, 1
      %p23 = scmp.eq.s32.totalorder %s11, 1
      %p24 = scmp.ne.s32.totalorder %s19, %s21
      %p25 = scmp.eq.s32.totalorder %s11, 0
      %p26 = por %p24, %p25
      %p27 = scmp.ne.s32.totalorder %s19, %s21
      %p28 = scmp.eq.s32.totalorder %s16, 1
      %p29 = por %p27, %p28
      %p30 = scmp.ne.s32.totalorder %s21, %s22
      %p31 = scmp.eq.s32.totalorder %s16, 0
      %p32 = por %p30, %p31
      %p33 = scmp.ne.s32.totalorder %s21, %s22
      %p34 = scmp.eq.s32.totalorder %s17, 1
      %p35 = por %p33, %p34
      %p37 = scmp.ne.s32.totalorder %s22, %s36
      %p38 = scmp.eq.s32.totalorder %s17, 0
      %p39 = por %p37, %p38
      %s40 = ssub.s32 %s11, %s18
      %p41 = scmp.eq.s32.totalorder %s40, 0
      %s43 = sadd.s32 %s42, 1
      %s44 = scalar_select %p41, %s42, %s43
      %p47 = pneg %p41
      %p48 = scmp.eq.s32.totalorder %s11, 1
      %p49 = por %p47, %p48
      %p50 = scmp.ne.s32.totalorder %s42, %s45
      %p51 = scmp.eq.s32.totalorder %s11, 0
      %p52 = por %p50, %p51
      %p53 = scmp.ne.s32.totalorder %s42, %s45
      %p54 = scmp.eq.s32.totalorder %s16, 1
      %p55 = por %p53, %p54
      %p56 = scmp.ne.s32.totalorder %s45, %s46
      %p57 = scmp.eq.s32.totalorder %s16, 0
      %p58 = por %p56, %p57
      %p59 = scmp.ne.s32.totalorder %s45, %s46
      %p60 = scmp.eq.s32.totalorder %s17, 1
      %p61 = por %p59, %p60
      %p63 = scmp.ne.s32.totalorder %s46, %s62
      %p64 = scmp.eq.s32.totalorder %s17, 0
      %p65 = por %p63, %p64
      %p66 = scmp.le.s32.totalorder 1, %s11
      %p67 = scmp.lt.s32.totalorder %s11, 3
      %p68 = pnand %p66, %p67
      %p69 = pneg %p68
      // Predicated region
      $region9: #{tpu_custom_call.1} parent=5 // pred_check
        _
      $region10: #{tpu_custom_call.1} parent=5 // pred_check_branch
        %71 = sbr.rel (%p68) target = $region12
      $region11: #{tpu_custom_call.1} parent=5 // pred_region
        %s72 = ssub.s32 %s11, 1
        // Predicated region
        $region13: #{tpu_custom_call.1} parent=11 // pred_check
          %p73 = pneg %p32
        $region14: #{tpu_custom_call.1} parent=11 // pred_check_branch
          %75 = sbr.rel (%p73) target = $region16
        $region15: #{tpu_custom_call.1} parent=11 // pred_region
          %s77 = ssub.s32 128, 128
          %78 = vsyncadd [#allocation3], %s77
          %s80 = sshll.u32 [#allocation2], 4
          %s81 = int_to_ptr.vmem [resolvable:$true] %s80
          %83 = dma.hbm_to_vmem [thread:$0]  %s0, 128, %s81, [#allocation3]
        $region16: #{tpu_custom_call.1} parent=11 // pred_fallthru
          _
      $region12: #{tpu_custom_call.1} parent=5 // pred_fallthru
        _
      %p84 = scmp.lt.s32.totalorder %s11, 2
      // Predicated region
      $region17: #{tpu_custom_call.1} parent=5 // pred_check
        %p85 = pneg %p84
      $region18: #{tpu_custom_call.1} parent=5 // pred_check_branch
        %87 = sbr.rel (%p85) target = $region20
      $region19: #{tpu_custom_call.1} parent=5 // pred_region
        _
      $region20: #{tpu_custom_call.1} parent=5 // pred_fallthru
        _
      %p88 = scmp.le.s32.totalorder 1, %s11
      %p89 = scmp.lt.s32.totalorder %s11, 3
      %p90 = pnand %p88, %p89
      %p91 = pneg %p90
      // Predicated region
      $region21: #{tpu_custom_call.1} parent=5 // pred_check
        _
      $region22: #{tpu_custom_call.1} parent=5 // pred_check_branch
        %93 = sbr.rel (%p90) target = $region24
      $region23: #{tpu_custom_call.1} parent=5 // pred_region
        %s94 = ssub.s32 %s11, 1
        // Predicated region
        $region25: #{tpu_custom_call.1} parent=23 // pred_check
          %p95 = pneg %p32
        $region26: #{tpu_custom_call.1} parent=23 // pred_check_branch
          %97 = sbr.rel (%p95) target = $region28
        $region27: #{tpu_custom_call.1} parent=23 // pred_region
          %98 = dma.done [#allocation3], 128
        $region28: #{tpu_custom_call.1} parent=23 // pred_fallthru
          _
        %p99 = pneg %p32
        %p100 = pneg %p29
        %p101 = pneg %p58
        %p102 = pneg %p55
        %s103 = sand.u32 %s45, 1
        %s104 = scalar_lea.sflag [#allocation4], %s103
        %s105 = sand.u32 %s45, 1
        %s106 = smul.addr %s105, 8
        %s107 = scalar_lea.vmem [#allocation5], %s106
        %v108 = vld [vmem:[#allocation2] sm:$0xff]
        %v109 = vadd.f32 %v108, 1.0
        %110 = vst [vmem:[%s107] sm:$0xff] %v109
        %s111 = sand.u32 %s45, 1
        %s112 = scalar_lea.sflag [#allocation4], %s111
        %s113 = sand.u32 %s45, 1
        %s114 = smul.addr %s113, 8
        %s115 = scalar_lea.vmem [#allocation5], %s114
        // Predicated region
        $region29: #{tpu_custom_call.1} parent=23 // pred_check
          %p116 = pneg %p55
        $region30: #{tpu_custom_call.1} parent=23 // pred_check_branch
          %118 = sbr.rel (%p116) target = $region32
        $region31: #{tpu_custom_call.1} parent=23 // pred_region
          %s120 = ssub.s32 128, 128
          %121 = vsyncadd %s112, %s120
          %s122 = smul.addr %s16, 128
          %s123 = scalar_lea.hbm %s1, %s122
          %s125 = sshll.u32 %s115, 4
          %s126 = int_to_ptr.vmem [resolvable:$true] %s125
          %128 = dma.vmem_to_hbm [thread:$0]  %s126, 128, %s123, %s112
        $region32: #{tpu_custom_call.1} parent=23 // pred_fallthru
          _
      $region24: #{tpu_custom_call.1} parent=5 // pred_fallthru
        _
      %p129 = scmp.le.s32.totalorder 2, %s11
      // Predicated region
      $region33: #{tpu_custom_call.1} parent=5 // pred_check
        %p130 = pneg %p129
      $region34: #{tpu_custom_call.1} parent=5 // pred_check_branch
        %132 = sbr.rel (%p130) target = $region36
      $region35: #{tpu_custom_call.1} parent=5 // pred_region
        %s133 = ssub.s32 %s11, 2
        // Predicated region
        $region37: #{tpu_custom_call.1} parent=35 // pred_check
          %p134 = pneg %p61
        $region38: #{tpu_custom_call.1} parent=35 // pred_check_branch
          %136 = sbr.rel (%p134) target = $region40
        $region39: #{tpu_custom_call.1} parent=35 // pred_region
          %s137 = sand.u32 %s46, 1
          %s138 = scalar_lea.sflag [#allocation4], %s137
          %s139 = sand.u32 %s46, 1
          %s140 = smul.addr %s139, 8
          %s141 = scalar_lea.vmem [#allocation5], %s140
          %142 = dma.done %s138, 128
        $region40: #{tpu_custom_call.1} parent=35 // pred_fallthru
          _
      $region36: #{tpu_custom_call.1} parent=5 // pred_fallthru
        _
    $region6: #{tpu_custom_call.1} parent=1 // loop_footer
      %s15 = sadd.s32 1, %s11
    $region7: #{tpu_custom_call.1} parent=1 // loop_footer_branch
      %10 = sbr.rel target = $region3
    $region8: #{tpu_custom_call.1} parent=1 // loop_exit
      _
    %143 = vsyncpa [#allocation3], 1
    %s144 = scalar_lea.sflag [#allocation3], 1
    %145 = vsyncpa %s144, 1
    %146 = vsyncpa [#allocation4], 1
    %s147 = scalar_lea.sflag [#allocation4], 1
    %148 = vsyncpa %s147, 1

// kernel: tpu_custom_call.1
$region0: #{tpu_custom_call.1}
  #allocation0 [shape = 'u32[]', space=smem, size = 0x4, offset = 0x4, fixed_abs, tag = 'smem constant byte address 0x4 - core index']
  #allocation1 [shape = 'u32[144,128]{1,0:T(1,128)}', space=vmem, size = 0x12000, scoped, tag = 'internal scratch']
  %s0 = inlined_call_operand.hbm [shape: f32[2,4,16], index: 0, kind: input, shape index: {}]
  %s1 = inlined_call_operand.vmem [shape: f32[4,7], index: 1, kind: input, shape index: {}]
  %s2 = inlined_call_operand.vmem [shape: f32[4,1], index: 2, kind: input, shape index: {}]
  %s3 = inlined_call_operand.hbm [shape: f32[2,4,16], index: 3, kind: output, shape index: {}]
  %s4 = sld [smem:[#allocation0]]
  $region49: #{tpu_custom_call.1} parent=0
    _
  %s6 = ssub.s32 1, %s4
  %s7 = scalar_select 0, %s6, %s4
  $region1: #{tpu_custom_call.1} parent=0
    #allocation2 [shape = 'u8[4096]{0}', space=vmem, size = 0x1000, scoped, tag = 'input window, operand 0']
    #allocation3 [shape = 's32[2]{0}', space=sflag, size = 0x8, scoped, tag = 'scoped memory for tpu_custom_call.1']
    #allocation4 [shape = 's32[2]{0}', space=sflag, size = 0x8, scoped, tag = 'scoped memory for tpu_custom_call.1']
    #allocation5 [shape = 'u8[4096]{0}', space=vmem, size = 0x1000, scoped, tag = 'output window, operand 0']
    %8 = vsyncpa [#allocation3], 0
    %s9 = scalar_lea.sflag [#allocation3], 1
    %10 = vsyncpa %s9, 0
    %11 = vsyncpa [#allocation4], 0
    %s12 = scalar_lea.sflag [#allocation4], 1
    %13 = vsyncpa %s12, 0
    loop: start=0, step=1, limit=4
    $region2: #{tpu_custom_call.1} parent=1 // loop_pre_header
      _
    $region3: #{tpu_custom_call.1} parent=1 // loop_header
      %s15 = sphi 0, %s19
      %p16 = scmp.ge.s32.totalorder %s15, 4
      %s22 = sphi 0, %s34
      %s23 = sphi 0, %s30
      %s24 = sphi 0, %s22
      %s25 = sphi 0, %s23
      %s26 = sphi 0, %s24
      %s27 = sphi 0, %s25
      %s39 = sphi 0, %s41
      %s42 = sphi 0, %s39
      %s43 = sphi 0, %s42
      %s59 = sphi 0, %s43
      %s65 = sphi 0, %s67
      %s68 = sphi 0, %s65
      %s69 = sphi 0, %s68
      %s85 = sphi 0, %s69
      %s91 = sphi 0, %s93
      %s94 = sphi 0, %s91
      %s95 = sphi 0, %s94
      %s111 = sphi 0, %s95
      %s119 = sphi 0, %s121
      %s122 = sphi 0, %s119
      %s123 = sphi 0, %s122
      %s139 = sphi 0, %s123
    $region4: #{tpu_custom_call.1} parent=1 // loop_header_branch
      %18 = sbr.rel (%p16) target = $region8
    $region5: #{tpu_custom_call.1} parent=1 // loop_body
      %s20 = ssub.s32 %s15, 1
      %s21 = ssub.s32 %s15, 2
      %s28 = sadd.s32 1, %s23
      %p29 = scmp.ge.s32.totalorder %s28, 1
      %s30 = scalar_select %p29, 0, %s28
      %s31 = sadd.s32 1, %s22
      %s32 = scalar_select %p29, %s31, %s22
      %p33 = scmp.ge.s32.totalorder %s32, 2
      %s34 = scalar_select %p33, 0, %s32
      %s35 = ssub.s32 %s22, %s34
      %s36 = ssub.s32 %s23, %s30
      %s37 = sor.u32 %s35, %s36
      %p38 = scmp.eq.s32.totalorder %s37, 0
      %s40 = sadd.s32 %s39, 1
      %s41 = scalar_select %p38, %s39, %s40
      %p44 = pneg %p38
      %p45 = scmp.eq.s32.totalorder %s15, 1
      %p46 = por %p44, %p45
      %p47 = scmp.ne.s32.totalorder %s39, %s42
      %p48 = scmp.eq.s32.totalorder %s15, 0
      %p49 = por %p47, %p48
      %p50 = scmp.ne.s32.totalorder %s39, %s42
      %p51 = scmp.eq.s32.totalorder %s20, 1
      %p52 = por %p50, %p51
      %p53 = scmp.ne.s32.totalorder %s42, %s43
      %p54 = scmp.eq.s32.totalorder %s20, 0
      %p55 = por %p53, %p54
      %p56 = scmp.ne.s32.totalorder %s42, %s43
      %p57 = scmp.eq.s32.totalorder %s21, 1
      %p58 = por %p56, %p57
      %p60 = scmp.ne.s32.totalorder %s43, %s59
      %p61 = scmp.eq.s32.totalorder %s21, 0
      %p62 = por %p60, %p61
      %s63 = ssub.s32 %s23, %s30
      %p64 = scmp.eq.s32.totalorder %s63, 0
      %s66 = sadd.s32 %s65, 1
      %s67 = scalar_select %p64, %s65, %s66
      %p70 = pneg %p64
      %p71 = scmp.eq.s32.totalorder %s15, 1
      %p72 = por %p70, %p71
      %p73 = scmp.ne.s32.totalorder %s65, %s68
      %p74 = scmp.eq.s32.totalorder %s15, 0
      %p75 = por %p73, %p74
      %p76 = scmp.ne.s32.totalorder %s65, %s68
      %p77 = scmp.eq.s32.totalorder %s20, 1
      %p78 = por %p76, %p77
      %p79 = scmp.ne.s32.totalorder %s68, %s69
      %p80 = scmp.eq.s32.totalorder %s20, 0
      %p81 = por %p79, %p80
      %p82 = scmp.ne.s32.totalorder %s68, %s69
      %p83 = scmp.eq.s32.totalorder %s21, 1
      %p84 = por %p82, %p83
      %p86 = scmp.ne.s32.totalorder %s69, %s85
      %p87 = scmp.eq.s32.totalorder %s21, 0
      %p88 = por %p86, %p87
      %s89 = ssub.s32 %s23, %s30
      %p90 = scmp.eq.s32.totalorder %s89, 0
      %s92 = sadd.s32 %s91, 1
      %s93 = scalar_select %p90, %s91, %s92
      %p96 = pneg %p90
      %p97 = scmp.eq.s32.totalorder %s15, 1
      %p98 = por %p96, %p97
      %p99 = scmp.ne.s32.totalorder %s91, %s94
      %p100 = scmp.eq.s32.totalorder %s15, 0
      %p101 = por %p99, %p100
      %p102 = scmp.ne.s32.totalorder %s91, %s94
      %p103 = scmp.eq.s32.totalorder %s20, 1
      %p104 = por %p102, %p103
      %p105 = scmp.ne.s32.totalorder %s94, %s95
      %p106 = scmp.eq.s32.totalorder %s20, 0
      %p107 = por %p105, %p106
      %p108 = scmp.ne.s32.totalorder %s94, %s95
      %p109 = scmp.eq.s32.totalorder %s21, 1
      %p110 = por %p108, %p109
      %p112 = scmp.ne.s32.totalorder %s95, %s111
      %p113 = scmp.eq.s32.totalorder %s21, 0
      %p114 = por %p112, %p113
      %s115 = ssub.s32 %s22, %s34
      %s116 = ssub.s32 %s23, %s30
      %s117 = sor.u32 %s115, %s116
      %p118 = scmp.eq.s32.totalorder %s117, 0
      %s120 = sadd.s32 %s119, 1
      %s121 = scalar_select %p118, %s119, %s120
      %p124 = pneg %p118
      %p125 = scmp.eq.s32.totalorder %s15, 1
      %p126 = por %p124, %p125
      %p127 = scmp.ne.s32.totalorder %s119, %s122
      %p128 = scmp.eq.s32.totalorder %s15, 0
      %p129 = por %p127, %p128
      %p130 = scmp.ne.s32.totalorder %s119, %s122
      %p131 = scmp.eq.s32.totalorder %s20, 1
      %p132 = por %p130, %p131
      %p133 = scmp.ne.s32.totalorder %s122, %s123
      %p134 = scmp.eq.s32.totalorder %s20, 0
      %p135 = por %p133, %p134
      %p136 = scmp.ne.s32.totalorder %s122, %s123
      %p137 = scmp.eq.s32.totalorder %s21, 1
      %p138 = por %p136, %p137
      %p140 = scmp.ne.s32.totalorder %s123, %s139
      %p141 = scmp.eq.s32.totalorder %s21, 0
      %p142 = por %p140, %p141
      %p143 = scmp.le.s32.totalorder 1, %s15
      %p144 = scmp.lt.s32.totalorder %s15, 3
      %p145 = pnand %p143, %p144
      %p146 = pneg %p145
      // Predicated region
      $region9: #{tpu_custom_call.1} parent=5 // pred_check
        _
      $region10: #{tpu_custom_call.1} parent=5 // pred_check_branch
        %148 = sbr.rel (%p145) target = $region12
      $region11: #{tpu_custom_call.1} parent=5 // pred_region
        %s149 = ssub.s32 %s15, 1
        // Predicated region
        $region13: #{tpu_custom_call.1} parent=11 // pred_check
          %p150 = pneg %p81
        $region14: #{tpu_custom_call.1} parent=11 // pred_check_branch
          %152 = sbr.rel (%p150) target = $region16
        $region15: #{tpu_custom_call.1} parent=11 // pred_region
          %p153 = scmp.lt.s32.totalorder %s25, 0
          %s154 = scalar_select %p153, %s25, 0
          %s155 = smul.addr %s154, 4
          %s156 = scalar_lea.vmem %s1, %s155
        $region16: #{tpu_custom_call.1} parent=11 // pred_fallthru
          _
        // Predicated region
        $region17: #{tpu_custom_call.1} parent=11 // pred_check
          %p157 = pneg %p107
        $region18: #{tpu_custom_call.1} parent=11 // pred_check_branch
          %159 = sbr.rel (%p157) target = $region20
        $region19: #{tpu_custom_call.1} parent=11 // pred_region
          %p160 = scmp.lt.s32.totalorder %s25, 0
          %s161 = scalar_select %p160, %s25, 0
          %s162 = smul.addr %s161, 4
          %s163 = scalar_lea.vmem %s2, %s162
        $region20: #{tpu_custom_call.1} parent=11 // pred_fallthru
          _
      $region12: #{tpu_custom_call.1} parent=5 // pred_fallthru
        _
      %p164 = scmp.lt.s32.totalorder %s15, 2
      // Predicated region
      $region21: #{tpu_custom_call.1} parent=5 // pred_check
        %p165 = pneg %p164
      $region22: #{tpu_custom_call.1} parent=5 // pred_check_branch
        %167 = sbr.rel (%p165) target = $region24
      $region23: #{tpu_custom_call.1} parent=5 // pred_region
        // Predicated region
        $region25: #{tpu_custom_call.1} parent=23 // pred_check
          %p168 = pneg %p49
        $region26: #{tpu_custom_call.1} parent=23 // pred_check_branch
          %170 = sbr.rel (%p168) target = $region28
        $region27: #{tpu_custom_call.1} parent=23 // pred_region
          %s171 = sand.u32 %s39, 1
          %s172 = scalar_lea.sflag [#allocation3], %s171
          %s173 = sand.u32 %s39, 1
          %s174 = smul.addr %s173, 4
          %s175 = scalar_lea.vmem [#allocation2], %s174
          %s177 = ssub.s32 64, 64
          %178 = vsyncadd %s172, %s177
          %s179 = sadd.s32 %s23, %s22
          %s180 = smul.addr %s179, 64
          %s181 = scalar_lea.hbm %s0, %s180
          %s183 = sshll.u32 %s175, 4
          %s184 = int_to_ptr.vmem [resolvable:$true] %s183
          %186 = dma.hbm_to_vmem [thread:$0]  %s181, 64, %s184, %s172
        $region28: #{tpu_custom_call.1} parent=23 // pred_fallthru
          _
      $region24: #{tpu_custom_call.1} parent=5 // pred_fallthru
        _
      %p187 = scmp.le.s32.totalorder 1, %s15
      %p188 = scmp.lt.s32.totalorder %s15, 3
      %p189 = pnand %p187, %p188
      %p190 = pneg %p189
      // Predicated region
      $region29: #{tpu_custom_call.1} parent=5 // pred_check
        _
      $region30: #{tpu_custom_call.1} parent=5 // pred_check_branch
        %192 = sbr.rel (%p189) target = $region32
      $region31: #{tpu_custom_call.1} parent=5 // pred_region
        %s193 = ssub.s32 %s15, 1
        %s194 = sand.u32 %s42, 1
        %s195 = scalar_lea.sflag [#allocation3], %s194
        %s196 = sand.u32 %s42, 1
        %s197 = smul.addr %s196, 4
        %s198 = scalar_lea.vmem [#allocation2], %s197
        // Predicated region
        $region33: #{tpu_custom_call.1} parent=31 // pred_check
          %p199 = pneg %p55
        $region34: #{tpu_custom_call.1} parent=31 // pred_check_branch
          %201 = sbr.rel (%p199) target = $region36
        $region35: #{tpu_custom_call.1} parent=31 // pred_region
          %202 = dma.done %s195, 64
        $region36: #{tpu_custom_call.1} parent=31 // pred_fallthru
          _
        %s203 = sand.u32 %s42, 1
        %s204 = scalar_lea.sflag [#allocation3], %s203
        %s205 = sand.u32 %s42, 1
        %s206 = smul.addr %s205, 4
        %s207 = scalar_lea.vmem [#allocation2], %s206
        %p208 = pneg %p55
        %p209 = pneg %p52
        %p210 = scmp.lt.s32.totalorder %s25, 0
        %s211 = scalar_select %p210, %s25, 0
        %s212 = smul.addr %s211, 4
        %s213 = scalar_lea.vmem %s1, %s212
        %p214 = pneg %p81
        %p215 = pneg %p78
        %p216 = scmp.lt.s32.totalorder %s25, 0
        %s217 = scalar_select %p216, %s25, 0
        %s218 = smul.addr %s217, 4
        %s219 = scalar_lea.vmem %s2, %s218
        %p220 = pneg %p107
        %p221 = pneg %p104
        %p222 = pneg %p135
        %p223 = pneg %p132
        %s224 = sand.u32 %s122, 1
        %s225 = scalar_lea.sflag [#allocation4], %s224
        %s226 = sand.u32 %s122, 1
        %s227 = smul.addr %s226, 4
        %s228 = scalar_lea.vmem [#allocation5], %s227
        %p229 = scmp.lt.s32.totalorder %s25, 0
        %s230 = scalar_select %p229, %s25, 0
        %s231 = smul.addr %s230, 4
        %s232 = scalar_lea.vmem %s1, %s231
        %p233 = scmp.lt.s32.totalorder %s25, 0
        %s234 = scalar_select %p233, %s25, 0
        %s235 = smul.addr %s234, 4
        %s236 = scalar_lea.vmem %s2, %s235
        %v237 = vld [vmem:[%s198] sm:$0xf]
        %239 = vrot.lane.b32.xlu0 %v237, 3
        %v240 = vpop.permute.xlu0 %239
        %vm242 = vcmask 23552
        %v243 = vsel %vm242, 0.0, %v240
        %vm244 = vcmask 154624
        %v245 = vsel %vm244, %v243, 0.0
        %v246 = vld [vmem:[%s232] sm:$0xf]
        %248 = vset.pattern.permute.xlu0 0
        %249 = vperm.xlu0 %248, %v246
        %v250 = vpop.permute.xlu0 %249
        %v252 = vmul.f32 %v250, %v245
        %v253 = vadd.f32 %v252, 0.0
        %254 = vset.pattern.permute.xlu0 1
        %255 = vperm.xlu0 %254, %v246
        %v256 = vpop.permute.xlu0 %255
        %v258 = vmul.f32 %v256, %v245
        %260 = vrot.lane.b32.xlu0 %v258, 127
        %v261 = vpop.permute.xlu0 %260
        %v263 = vadd.f32 %v253, %v261
        %264 = vset.pattern.permute.xlu0 2
        %265 = vperm.xlu0 %264, %v246
        %v266 = vpop.permute.xlu0 %265
        %v268 = vmul.f32 %v266, %v245
        %270 = vrot.lane.b32.xlu0 %v268, 126
        %v271 = vpop.permute.xlu0 %270
        %v273 = vadd.f32 %v263, %v271
        %274 = vset.pattern.permute.xlu0 3
        %275 = vperm.xlu0 %274, %v246
        %v276 = vpop.permute.xlu0 %275
        %v278 = vmul.f32 %v276, %v245
        %280 = vrot.lane.b32.xlu0 %v278, 125
        %v281 = vpop.permute.xlu0 %280
        %v283 = vadd.f32 %v273, %v281
        %284 = vset.pattern.permute.xlu0 4
        %285 = vperm.xlu0 %284, %v246
        %v286 = vpop.permute.xlu0 %285
        %v288 = vmul.f32 %v286, %v245
        %290 = vrot.lane.b32.xlu0 %v288, 124
        %v291 = vpop.permute.xlu0 %290
        %v293 = vadd.f32 %v283, %v291
        %294 = vset.pattern.permute.xlu0 5
        %295 = vperm.xlu0 %294, %v246
        %v296 = vpop.permute.xlu0 %295
        %v298 = vmul.f32 %v296, %v245
        %300 = vrot.lane.b32.xlu0 %v298, 123
        %v301 = vpop.permute.xlu0 %300
        %v303 = vadd.f32 %v293, %v301
        %304 = vset.pattern.permute.xlu0 6
        %305 = vperm.xlu0 %304, %v246
        %v306 = vpop.permute.xlu0 %305
        %v308 = vmul.f32 %v306, %v245
        %310 = vrot.lane.b32.xlu0 %v308, 122
        %v311 = vpop.permute.xlu0 %310
        %v313 = vadd.f32 %v303, %v311
        %v314 = vld [vmem:[%s236] sm:$0xf]
        %316 = vset.pattern.permute.xlu0 0
        %317 = vperm.xlu0 %316, %v314
        %v318 = vpop.permute.xlu0 %317
        %v320 = vadd.f32 %v313, %v318
        %vm321 = vcmask 125952
        %322 = vst.msk [vmem:[%s228] sm:$0xf] %vm321, %v320
        %s323 = sand.u32 %s122, 1
        %s324 = scalar_lea.sflag [#allocation4], %s323
        %s325 = sand.u32 %s122, 1
        %s326 = smul.addr %s325, 4
        %s327 = scalar_lea.vmem [#allocation5], %s326
        // Predicated region
        $region37: #{tpu_custom_call.1} parent=31 // pred_check
          %p328 = pneg %p132
        $region38: #{tpu_custom_call.1} parent=31 // pred_check_branch
          %330 = sbr.rel (%p328) target = $region40
        $region39: #{tpu_custom_call.1} parent=31 // pred_region
          %s332 = ssub.s32 64, 64
          %333 = vsyncadd %s324, %s332
          %s334 = sadd.s32 %s25, %s24
          %s335 = smul.addr %s334, 64
          %s336 = scalar_lea.hbm %s3, %s335
          %s338 = sshll.u32 %s327, 4
          %s339 = int_to_ptr.vmem [resolvable:$true] %s338
          %341 = dma.vmem_to_hbm [thread:$0]  %s339, 64, %s336, %s324
        $region40: #{tpu_custom_call.1} parent=31 // pred_fallthru
          _
      $region32: #{tpu_custom_call.1} parent=5 // pred_fallthru
        _
      %p342 = scmp.le.s32.totalorder 2, %s15
      // Predicated region
      $region41: #{tpu_custom_call.1} parent=5 // pred_check
        %p343 = pneg %p342
      $region42: #{tpu_custom_call.1} parent=5 // pred_check_branch
        %345 = sbr.rel (%p343) target = $region44
      $region43: #{tpu_custom_call.1} parent=5 // pred_region
        %s346 = ssub.s32 %s15, 2
        // Predicated region
        $region45: #{tpu_custom_call.1} parent=43 // pred_check
          %p347 = pneg %p138
        $region46: #{tpu_custom_call.1} parent=43 // pred_check_branch
          %349 = sbr.rel (%p347) target = $region48
        $region47: #{tpu_custom_call.1} parent=43 // pred_region
          %s350 = sand.u32 %s123, 1
          %s351 = scalar_lea.sflag [#allocation4], %s350
          %s352 = sand.u32 %s123, 1
          %s353 = smul.addr %s352, 4
          %s354 = scalar_lea.vmem [#allocation5], %s353
          %355 = dma.done %s351, 64
        $region48: #{tpu_custom_call.1} parent=43 // pred_fallthru
          _
      $region44: #{tpu_custom_call.1} parent=5 // pred_fallthru
        _
    $region6: #{tpu_custom_call.1} parent=1 // loop_footer
      %s19 = sadd.s32 1, %s15
    $region7: #{tpu_custom_call.1} parent=1 // loop_footer_branch
      %14 = sbr.rel target = $region3
    $region8: #{tpu_custom_call.1} parent=1 // loop_exit
      _
    %356 = vsyncpa [#allocation3], 1
    %s357 = scalar_lea.sflag [#allocation3], 1
    %358 = vsyncpa %s357, 1
    %359 = vsyncpa [#allocation4], 1
    %s360 = scalar_lea.sflag [#allocation4], 1
    %361 = vsyncpa %s360, 1

</llo_original>
